<compile_context>
chip_gen: v6e
topology: v6e:2x2x1
jax: 0.10.0
libtpu: 0.0.40
codegen_flags: <defaults>
</compile_context>

<pallas_src>
import functools

import jax
import jax.numpy as jnp
from jax.experimental import pallas as pl
from jax.experimental.pallas import tpu as pltpu


def _fused_autoencoder_kernel(x_ref, *rest, relu_flags):
    """Whole forward pass for one batch tile: chained matmul (+ReLU) on MXU."""
    w_refs = rest[:-1]
    o_ref = rest[-1]
    h = x_ref[...]
    for w_ref, apply_relu in zip(w_refs, relu_flags):
        h = jnp.dot(h, w_ref[...], preferred_element_type=jnp.float32)
        if apply_relu:
            h = jnp.maximum(h, 0.0)
    o_ref[...] = h.astype(o_ref.dtype)


def kls_autoencoder_forward(x, enc_ws, dec_ws, *, batch_tile=512):
    """Fused autoencoder forward: one pallas_call, batch-tiled grid."""
    weights = list(enc_ws) + list(dec_ws)
    # last ReLU of each wing is dropped (mirrors ravel()[:-1] in wing()).
    relu_flags = tuple(
        [i < len(enc_ws) - 1 for i in range(len(enc_ws))]
        + [i < len(dec_ws) - 1 for i in range(len(dec_ws))]
    )

    B, Din = x.shape
    assert weights[0].shape[0] == Din
    Dout = weights[-1].shape[1]

    # Batch tile: full batch if small, else a large multiple-of-8 tile so the
    # ~0.35us/step overhead amortizes and x/out stream through double buffers.
    TB = B if B <= batch_tile else batch_tile
    grid = (pl.cdiv(B, TB),)

    in_specs = [pl.BlockSpec((TB, Din), lambda b: (b, 0))]
    for w in weights:
        # Constant index_map -> weights DMA'd once, resident across batch tiles.
        in_specs.append(pl.BlockSpec(w.shape, lambda b: (0, 0)))
    out_spec = pl.BlockSpec((TB, Dout), lambda b: (b, 0))

    return pl.pallas_call(
        functools.partial(_fused_autoencoder_kernel, relu_flags=relu_flags),
        out_shape=jax.ShapeDtypeStruct((B, Dout), x.dtype),
        grid=grid,
        in_specs=in_specs,
        out_specs=out_spec,
        compiler_params=pltpu.CompilerParams(
            dimension_semantics=("parallel",)  # batch axis -> megacore on v7x
        ),
    )(x, *weights)


def wing_params(key, dims):
    """Deterministic init for one wing: list of (in, out) weight matrices."""
    ws = []
    for i, (din, dout) in enumerate(zip(dims[:-1], dims[1:])):
        k = jax.random.fold_in(key, i)
        bound = 1.0 / jnp.sqrt(jnp.float32(din))  # nn.Linear-style scale
        ws.append(jax.random.uniform(k, (din, dout), jnp.float32, -bound, bound))
    return ws


def reference_forward(x, enc_ws, dec_ws):
    """Pure-JAX reference matching the PyTorch module semantics."""
    def wing(x, ws):
        n = len(ws)
        for i, w in enumerate(ws):
            x = x @ w
            if i < n - 1:
                x = jnp.maximum(x, 0.0)
        return x
    return wing(wing(x, enc_ws), dec_ws)


if __name__ == "__main__":
    key = jax.random.PRNGKey(0)
    k_x, k_enc, k_dec = jax.random.split(key, 3)

    batch = 8
    encoder_dims = [64, 32, 16]
    decoder_dims = [16, 32, 64]

    x = jax.random.normal(k_x, (batch, encoder_dims[0]), jnp.float32)
    enc_ws = wing_params(k_enc, encoder_dims)
    dec_ws = wing_params(k_dec, decoder_dims)

    out = kls_autoencoder_forward(x, enc_ws, dec_ws)
    out = jax.block_until_ready(out)

    ref = reference_forward(x, enc_ws, dec_ws)
    assert out.shape == (batch, decoder_dims[-1])
    assert jnp.allclose(out, ref, atol=1e-5, rtol=1e-5)

    print("KERNEL_OK")
</pallas_src>

<mosaic_0001>
module attributes {stable_mosaic.version = 11 : i64} {
  func.func @_fused_autoencoder_kernel(%arg0: i32, %arg1: memref<8x64xf32, #tpu.memory_space<vmem>>, %arg2: memref<64x32xf32, #tpu.memory_space<vmem>>, %arg3: memref<32x16xf32, #tpu.memory_space<vmem>>, %arg4: memref<16x32xf32, #tpu.memory_space<vmem>>, %arg5: memref<32x64xf32, #tpu.memory_space<vmem>>, %arg6: memref<8x64xf32, #tpu.memory_space<vmem>>) attributes {dimension_semantics = [#tpu.dimension_semantics<parallel>], iteration_bounds = array<i64: 1>, scalar_prefetch = 0 : i64, scratch_operands = 0 : i64, tpu.core_type = #tpu.core_type<tc>, window_params = [{transform_indices = @transform_0, window_bounds = array<i64: 8, 64>}, {pipeline_mode = #tpu.pipeline_mode<synchronous>, transform_indices = @transform_1, window_bounds = array<i64: 64, 32>}, {pipeline_mode = #tpu.pipeline_mode<synchronous>, transform_indices = @transform_2, window_bounds = array<i64: 32, 16>}, {pipeline_mode = #tpu.pipeline_mode<synchronous>, transform_indices = @transform_3, window_bounds = array<i64: 16, 32>}, {pipeline_mode = #tpu.pipeline_mode<synchronous>, transform_indices = @transform_4, window_bounds = array<i64: 32, 64>}, {transform_indices = @transform_5, window_bounds = array<i64: 8, 64>}]} {
    %c0 = arith.constant 0 : index
    %c0_0 = arith.constant 0 : index
    %0 = vector.load %arg1[%c0, %c0_0] : memref<8x64xf32, #tpu.memory_space<vmem>>, vector<8x64xf32>
    %c0_1 = arith.constant 0 : index
    %c0_2 = arith.constant 0 : index
    %1 = vector.load %arg2[%c0_1, %c0_2] : memref<64x32xf32, #tpu.memory_space<vmem>>, vector<64x32xf32>
    %cst = arith.constant dense<0.000000e+00> : vector<8x32xf32>
    %2 = tpu.matmul %0, %1, %cst {dimension_numbers = #tpu.dot_dimension_numbers<[1], [0], [0], [1], [0, 0, 1, 1], [], []>} : vector<8x64xf32>, vector<64x32xf32>, vector<8x32xf32> -> vector<8x32xf32>
    %cst_3 = arith.constant 0.000000e+00 : f32
    %3 = vector.broadcast %cst_3 : f32 to vector<8x32xf32>
    %4 = arith.maximumf %2, %3 : vector<8x32xf32>
    %c0_4 = arith.constant 0 : index
    %c0_5 = arith.constant 0 : index
    %5 = vector.load %arg3[%c0_4, %c0_5] : memref<32x16xf32, #tpu.memory_space<vmem>>, vector<32x16xf32>
    %cst_6 = arith.constant dense<0.000000e+00> : vector<8x16xf32>
    %6 = tpu.matmul %4, %5, %cst_6 {dimension_numbers = #tpu.dot_dimension_numbers<[1], [0], [0], [1], [0, 0, 1, 1], [], []>} : vector<8x32xf32>, vector<32x16xf32>, vector<8x16xf32> -> vector<8x16xf32>
    %c0_7 = arith.constant 0 : index
    %c0_8 = arith.constant 0 : index
    %7 = vector.load %arg4[%c0_7, %c0_8] : memref<16x32xf32, #tpu.memory_space<vmem>>, vector<16x32xf32>
    %cst_9 = arith.constant dense<0.000000e+00> : vector<8x32xf32>
    %8 = tpu.matmul %6, %7, %cst_9 {dimension_numbers = #tpu.dot_dimension_numbers<[1], [0], [0], [1], [0, 0, 1, 1], [], []>} : vector<8x16xf32>, vector<16x32xf32>, vector<8x32xf32> -> vector<8x32xf32>
    %cst_10 = arith.constant 0.000000e+00 : f32
    %9 = vector.broadcast %cst_10 : f32 to vector<8x32xf32>
    %10 = arith.maximumf %8, %9 : vector<8x32xf32>
    %c0_11 = arith.constant 0 : index
    %c0_12 = arith.constant 0 : index
    %11 = vector.load %arg5[%c0_11, %c0_12] : memref<32x64xf32, #tpu.memory_space<vmem>>, vector<32x64xf32>
    %cst_13 = arith.constant dense<0.000000e+00> : vector<8x64xf32>
    %12 = tpu.matmul %10, %11, %cst_13 {dimension_numbers = #tpu.dot_dimension_numbers<[1], [0], [0], [1], [0, 0, 1, 1], [], []>} : vector<8x32xf32>, vector<32x64xf32>, vector<8x64xf32> -> vector<8x64xf32>
    %c0_14 = arith.constant 0 : index
    %c0_15 = arith.constant 0 : index
    %13 = vector.load %arg6[%c0_14, %c0_15] : memref<8x64xf32, #tpu.memory_space<vmem>>, vector<8x64xf32>
    tpu.vector_store %arg6[%c0_14, %c0_15], %12 {strides = array<i32>} : memref<8x64xf32, #tpu.memory_space<vmem>>, vector<8x64xf32>,
    return
  }
  func.func @transform_0(%arg0: i32) -> (i32, i32) {
    %c0_i32 = arith.constant 0 : i32
    %c0_i32_0 = arith.constant 0 : i32
    return %arg0, %c0_i32 : i32, i32
  }
  func.func @transform_1(%arg0: i32) -> (i32, i32) {
    %c0_i32 = arith.constant 0 : i32
    %c0_i32_0 = arith.constant 0 : i32
    %c0_i32_1 = arith.constant 0 : i32
    return %c0_i32, %c0_i32_0 : i32, i32
  }
  func.func @transform_2(%arg0: i32) -> (i32, i32) {
    %c0_i32 = arith.constant 0 : i32
    %c0_i32_0 = arith.constant 0 : i32
    %c0_i32_1 = arith.constant 0 : i32
    return %c0_i32, %c0_i32_0 : i32, i32
  }
  func.func @transform_3(%arg0: i32) -> (i32, i32) {
    %c0_i32 = arith.constant 0 : i32
    %c0_i32_0 = arith.constant 0 : i32
    %c0_i32_1 = arith.constant 0 : i32
    return %c0_i32, %c0_i32_0 : i32, i32
  }
  func.func @transform_4(%arg0: i32) -> (i32, i32) {
    %c0_i32 = arith.constant 0 : i32
    %c0_i32_0 = arith.constant 0 : i32
    %c0_i32_1 = arith.constant 0 : i32
    return %c0_i32, %c0_i32_0 : i32, i32
  }
  func.func @transform_5(%arg0: i32) -> (i32, i32) {
    %c0_i32 = arith.constant 0 : i32
    %c0_i32_0 = arith.constant 0 : i32
    return %arg0, %c0_i32 : i32, i32
  }
}

</mosaic_0001>

<llo_original>
// kernel: tpu_custom_call.1
$region0: #{tpu_custom_call.1}
  #allocation0 [shape = 'u32[]', space=smem, size = 0x4, offset = 0x4, fixed_abs, tag = 'smem constant byte address 0x4 - core index']
  #allocation1 [shape = 'u32[144,128]{1,0:T(1,128)}', space=vmem, size = 0x12000, scoped, tag = 'internal scratch']
  %s0 = inlined_call_operand.vmem [shape: f32[8,64], index: 0, kind: input, shape index: {}]
  %s1 = inlined_call_operand.vmem [shape: f32[64,32], index: 1, kind: input, shape index: {}]
  %s2 = inlined_call_operand.vmem [shape: f32[32,16], index: 2, kind: input, shape index: {}]
  %s3 = inlined_call_operand.vmem [shape: f32[16,32], index: 3, kind: input, shape index: {}]
  %s4 = inlined_call_operand.vmem [shape: f32[32,64], index: 4, kind: input, shape index: {}]
  %s5 = inlined_call_operand.hbm [shape: f32[8,64], index: 5, kind: output, shape index: {}]
  %s6 = sld [smem:[#allocation0]]
  $region30: #{tpu_custom_call.1} parent=0
    _
  %s8 = ssub.s32 1, %s6
  %s9 = scalar_select 0, %s8, %s6
  $region1: #{tpu_custom_call.1} parent=0
    #allocation2 [shape = 'u8[4096]{0}', space=vmem, size = 0x1000, scoped, tag = 'output window, operand 0, single buffered']
    #allocation3 [shape = 's32[1]{0}', space=sflag, size = 0x4, scoped, tag = 'scoped memory for tpu_custom_call.1']
    %10 = vsyncpa [#allocation3], 0
    // Predicated region
    $region2: #{tpu_custom_call.1} parent=1 // pred_check
      _
    $region3: #{tpu_custom_call.1} parent=1 // pred_check_branch
      %12 = sbr.rel (0) target = $region5
    $region4: #{tpu_custom_call.1} parent=1 // pred_region
      _
    $region5: #{tpu_custom_call.1} parent=1 // pred_fallthru
      _
    // Predicated region
    $region6: #{tpu_custom_call.1} parent=1 // pred_check
      _
    $region7: #{tpu_custom_call.1} parent=1 // pred_check_branch
      %14 = sbr.rel (0) target = $region9
    $region8: #{tpu_custom_call.1} parent=1 // pred_region
      _
    $region9: #{tpu_custom_call.1} parent=1 // pred_fallthru
      _
    // Predicated region
    $region10: #{tpu_custom_call.1} parent=1 // pred_check
      _
    $region11: #{tpu_custom_call.1} parent=1 // pred_check_branch
      %16 = sbr.rel (0) target = $region13
    $region12: #{tpu_custom_call.1} parent=1 // pred_region
      _
    $region13: #{tpu_custom_call.1} parent=1 // pred_fallthru
      _
    // Predicated region
    $region14: #{tpu_custom_call.1} parent=1 // pred_check
      _
    $region15: #{tpu_custom_call.1} parent=1 // pred_check_branch
      %18 = sbr.rel (0) target = $region17
    $region16: #{tpu_custom_call.1} parent=1 // pred_region
      _
    $region17: #{tpu_custom_call.1} parent=1 // pred_fallthru
      _
    // Predicated region
    $region18: #{tpu_custom_call.1} parent=1 // pred_check
      _
    $region19: #{tpu_custom_call.1} parent=1 // pred_check_branch
      %20 = sbr.rel (0) target = $region21
    $region20: #{tpu_custom_call.1} parent=1 // pred_region
      _
    $region21: #{tpu_custom_call.1} parent=1 // pred_fallthru
      _
    %v21 = vld [vmem:[%s0] sm:$0xff]
    %v22 = vld [vmem:[%s1] sm:$0xff]
    %v23 = vld [vmem:[%s1 + $0x8] sm:$0xff]
    %v24 = vld [vmem:[%s1 + $0x10] sm:$0xff]
    %v25 = vld [vmem:[%s1 + $0x18] sm:$0xff]
    %v26 = vld [vmem:[%s1 + $0x20] sm:$0xff]
    %v27 = vld [vmem:[%s1 + $0x28] sm:$0xff]
    %v28 = vld [vmem:[%s1 + $0x30] sm:$0xff]
    %v29 = vld [vmem:[%s1 + $0x38] sm:$0xff]
    %vm30 = vcmask 523264
    %v32 = vsel %vm30, %v21, 0
    %34 = vmatprep.subr.mxu0 0.0
    %35 = vmatpush1.msra.mxu0 0.0
    %36 = vmatprep.subr.mxu0 0.0
    %37 = vmatpush1.msra.mxu0 0.0
    %38 = vmatprep.subr.mxu0 0.0
    %39 = vmatpush1.msra.mxu0 0.0
    %40 = vmatprep.subr.mxu0 0.0
    %41 = vmatpush1.msra.mxu0 0.0
    %42 = vmatprep.subr.mxu0 0.0
    %43 = vmatpush1.msra.mxu0 0.0
    %44 = vmatprep.subr.mxu0 0.0
    %45 = vmatpush1.msra.mxu0 0.0
    %46 = vmatprep.subr.mxu0 0.0
    %47 = vmatpush1.msra.mxu0 0.0
    %48 = vmatprep.subr.mxu0 0.0
    %49 = vmatpush1.msra.mxu0 0.0
    %50 = vmatprep.subr.mxu0 0.0
    %51 = vmatpush1.msra.mxu0 %v29
    %52 = vmatprep.subr.mxu0 0.0
    %53 = vmatpush1.msra.mxu0 %v28
    %54 = vmatprep.subr.mxu0 0.0
    %55 = vmatpush1.msra.mxu0 %v27
    %56 = vmatprep.subr.mxu0 0.0
    %57 = vmatpush1.msra.mxu0 %v26
    %58 = vmatprep.subr.mxu0 0.0
    %59 = vmatpush1.msra.mxu0 %v25
    %60 = vmatprep.subr.mxu0 0.0
    %61 = vmatpush1.msra.mxu0 %v24
    %62 = vmatprep.subr.mxu0 0.0
    %63 = vmatpush1.msra.mxu0 %v23
    %64 = vmatprep.subr.mxu0 0.0
    %65 = vmatpush1.msra.mxu0 %v22
    %66 = vmatprep.subr.mxu0 0.0
    %67 = vmatpush2.msra.mxu0 0.0
    %68 = vmatprep.subr.mxu0 0.0
    %69 = vmatpush2.msra.mxu0 0.0
    %70 = vmatprep.subr.mxu0 0.0
    %71 = vmatpush2.msra.mxu0 0.0
    %72 = vmatprep.subr.mxu0 0.0
    %73 = vmatpush2.msra.mxu0 0.0
    %74 = vmatprep.subr.mxu0 0.0
    %75 = vmatpush2.msra.mxu0 0.0
    %76 = vmatprep.subr.mxu0 0.0
    %77 = vmatpush2.msra.mxu0 0.0
    %78 = vmatprep.subr.mxu0 0.0
    %79 = vmatpush2.msra.mxu0 0.0
    %80 = vmatprep.subr.mxu0 0.0
    %81 = vmatpush2.msra.mxu0 0.0
    %82 = vmatprep.subr.mxu0 0.0
    %83 = vmatpush2.msra.mxu0 0.0
    %84 = vmatprep.subr.mxu0 0.0
    %85 = vmatpush2.msra.mxu0 0.0
    %86 = vmatprep.subr.mxu0 0.0
    %87 = vmatpush2.msra.mxu0 0.0
    %88 = vmatprep.subr.mxu0 0.0
    %89 = vmatpush2.msra.mxu0 0.0
    %90 = vmatprep.subr.mxu0 0.0
    %91 = vmatpush2.msra.mxu0 0.0
    %92 = vmatprep.subr.mxu0 0.0
    %93 = vmatpush2.msra.mxu0 0.0
    %94 = vmatprep.subr.mxu0 0.0
    %95 = vmatpush2.msra.mxu0 0.0
    %96 = vmatprep.subr.mxu0 0.0
    %97 = vmatpush2.msra.mxu0 0.0
    %98 = vmatprep.mubr.f32.mxu0 0.0
    %99 = vmatmul.mubr.f32.gmra.mxu0 %v32
    %v100 = vpop.f32.mrf.mxu0
    %v101 = vadd.f32 0.0, %v100
    %v102 = vpop.f32.mrf.mxu0
    %103 = vdwg.mxu0
    %v104 = vmax.f32 %v101, 0.0
    %v105 = vld [vmem:[%s2] sm:$0xff]
    %v106 = vld [vmem:[%s2 + $0x8] sm:$0xff]
    %v107 = vld [vmem:[%s2 + $0x10] sm:$0xff]
    %v108 = vld [vmem:[%s2 + $0x18] sm:$0xff]
    %vm109 = vcmask 261120
    %v111 = vsel %vm109, %v104, 0
    %113 = vmatprep.subr.mxu0 0.0
    %114 = vmatpush1.msra.mxu0 0.0
    %115 = vmatprep.subr.mxu0 0.0
    %116 = vmatpush1.msra.mxu0 0.0
    %117 = vmatprep.subr.mxu0 0.0
    %118 = vmatpush1.msra.mxu0 0.0
    %119 = vmatprep.subr.mxu0 0.0
    %120 = vmatpush1.msra.mxu0 0.0
    %121 = vmatprep.subr.mxu0 0.0
    %122 = vmatpush1.msra.mxu0 0.0
    %123 = vmatprep.subr.mxu0 0.0
    %124 = vmatpush1.msra.mxu0 0.0
    %125 = vmatprep.subr.mxu0 0.0
    %126 = vmatpush1.msra.mxu0 0.0
    %127 = vmatprep.subr.mxu0 0.0
    %128 = vmatpush1.msra.mxu0 0.0
    %129 = vmatprep.subr.mxu0 0.0
    %130 = vmatpush1.msra.mxu0 0.0
    %131 = vmatprep.subr.mxu0 0.0
    %132 = vmatpush1.msra.mxu0 0.0
    %133 = vmatprep.subr.mxu0 0.0
    %134 = vmatpush1.msra.mxu0 0.0
    %135 = vmatprep.subr.mxu0 0.0
    %136 = vmatpush1.msra.mxu0 0.0
    %137 = vmatprep.subr.mxu0 0.0
    %138 = vmatpush1.msra.mxu0 %v108
    %139 = vmatprep.subr.mxu0 0.0
    %140 = vmatpush1.msra.mxu0 %v107
    %141 = vmatprep.subr.mxu0 0.0
    %142 = vmatpush1.msra.mxu0 %v106
    %143 = vmatprep.subr.mxu0 0.0
    %144 = vmatpush1.msra.mxu0 %v105
    %145 = vmatprep.subr.mxu0 0.0
    %146 = vmatpush2.msra.mxu0 0.0
    %147 = vmatprep.subr.mxu0 0.0
    %148 = vmatpush2.msra.mxu0 0.0
    %149 = vmatprep.subr.mxu0 0.0
    %150 = vmatpush2.msra.mxu0 0.0
    %151 = vmatprep.subr.mxu0 0.0
    %152 = vmatpush2.msra.mxu0 0.0
    %153 = vmatprep.subr.mxu0 0.0
    %154 = vmatpush2.msra.mxu0 0.0
    %155 = vmatprep.subr.mxu0 0.0
    %156 = vmatpush2.msra.mxu0 0.0
    %157 = vmatprep.subr.mxu0 0.0
    %158 = vmatpush2.msra.mxu0 0.0
    %159 = vmatprep.subr.mxu0 0.0
    %160 = vmatpush2.msra.mxu0 0.0
    %161 = vmatprep.subr.mxu0 0.0
    %162 = vmatpush2.msra.mxu0 0.0
    %163 = vmatprep.subr.mxu0 0.0
    %164 = vmatpush2.msra.mxu0 0.0
    %165 = vmatprep.subr.mxu0 0.0
    %166 = vmatpush2.msra.mxu0 0.0
    %167 = vmatprep.subr.mxu0 0.0
    %168 = vmatpush2.msra.mxu0 0.0
    %169 = vmatprep.subr.mxu0 0.0
    %170 = vmatpush2.msra.mxu0 0.0
    %171 = vmatprep.subr.mxu0 0.0
    %172 = vmatpush2.msra.mxu0 0.0
    %173 = vmatprep.subr.mxu0 0.0
    %174 = vmatpush2.msra.mxu0 0.0
    %175 = vmatprep.subr.mxu0 0.0
    %176 = vmatpush2.msra.mxu0 0.0
    %177 = vmatprep.mubr.f32.mxu0 0.0
    %178 = vmatmul.mubr.f32.gmra.mxu0 %v111
    %v179 = vpop.f32.mrf.mxu0
    %v180 = vadd.f32 0.0, %v179
    %v181 = vpop.f32.mrf.mxu0
    %182 = vdwg.mxu0
    %v183 = vld [vmem:[%s3] sm:$0xff]
    %v184 = vld [vmem:[%s3 + $0x8] sm:$0xff]
    %vm185 = vcmask 130048
    %v187 = vsel %vm185, %v180, 0
    %189 = vmatprep.subr.mxu0 0.0
    %190 = vmatpush1.msra.mxu0 0.0
    %191 = vmatprep.subr.mxu0 0.0
    %192 = vmatpush1.msra.mxu0 0.0
    %193 = vmatprep.subr.mxu0 0.0
    %194 = vmatpush1.msra.mxu0 0.0
    %195 = vmatprep.subr.mxu0 0.0
    %196 = vmatpush1.msra.mxu0 0.0
    %197 = vmatprep.subr.mxu0 0.0
    %198 = vmatpush1.msra.mxu0 0.0
    %199 = vmatprep.subr.mxu0 0.0
    %200 = vmatpush1.msra.mxu0 0.0
    %201 = vmatprep.subr.mxu0 0.0
    %202 = vmatpush1.msra.mxu0 0.0
    %203 = vmatprep.subr.mxu0 0.0
    %204 = vmatpush1.msra.mxu0 0.0
    %205 = vmatprep.subr.mxu0 0.0
    %206 = vmatpush1.msra.mxu0 0.0
    %207 = vmatprep.subr.mxu0 0.0
    %208 = vmatpush1.msra.mxu0 0.0
    %209 = vmatprep.subr.mxu0 0.0
    %210 = vmatpush1.msra.mxu0 0.0
    %211 = vmatprep.subr.mxu0 0.0
    %212 = vmatpush1.msra.mxu0 0.0
    %213 = vmatprep.subr.mxu0 0.0
    %214 = vmatpush1.msra.mxu0 0.0
    %215 = vmatprep.subr.mxu0 0.0
    %216 = vmatpush1.msra.mxu0 0.0
    %217 = vmatprep.subr.mxu0 0.0
    %218 = vmatpush1.msra.mxu0 %v184
    %219 = vmatprep.subr.mxu0 0.0
    %220 = vmatpush1.msra.mxu0 %v183
    %221 = vmatprep.subr.mxu0 0.0
    %222 = vmatpush2.msra.mxu0 0.0
    %223 = vmatprep.subr.mxu0 0.0
    %224 = vmatpush2.msra.mxu0 0.0
    %225 = vmatprep.subr.mxu0 0.0
    %226 = vmatpush2.msra.mxu0 0.0
    %227 = vmatprep.subr.mxu0 0.0
    %228 = vmatpush2.msra.mxu0 0.0
    %229 = vmatprep.subr.mxu0 0.0
    %230 = vmatpush2.msra.mxu0 0.0
    %231 = vmatprep.subr.mxu0 0.0
    %232 = vmatpush2.msra.mxu0 0.0
    %233 = vmatprep.subr.mxu0 0.0
    %234 = vmatpush2.msra.mxu0 0.0
    %235 = vmatprep.subr.mxu0 0.0
    %236 = vmatpush2.msra.mxu0 0.0
    %237 = vmatprep.subr.mxu0 0.0
    %238 = vmatpush2.msra.mxu0 0.0
    %239 = vmatprep.subr.mxu0 0.0
    %240 = vmatpush2.msra.mxu0 0.0
    %241 = vmatprep.subr.mxu0 0.0
    %242 = vmatpush2.msra.mxu0 0.0
    %243 = vmatprep.subr.mxu0 0.0
    %244 = vmatpush2.msra.mxu0 0.0
    %245 = vmatprep.subr.mxu0 0.0
    %246 = vmatpush2.msra.mxu0 0.0
    %247 = vmatprep.subr.mxu0 0.0
    %248 = vmatpush2.msra.mxu0 0.0
    %249 = vmatprep.subr.mxu0 0.0
    %250 = vmatpush2.msra.mxu0 0.0
    %251 = vmatprep.subr.mxu0 0.0
    %252 = vmatpush2.msra.mxu0 0.0
    %253 = vmatprep.mubr.f32.mxu0 0.0
    %254 = vmatmul.mubr.f32.gmra.mxu0 %v187
    %v255 = vpop.f32.mrf.mxu0
    %v256 = vadd.f32 0.0, %v255
    %v257 = vpop.f32.mrf.mxu0
    %258 = vdwg.mxu0
    %v259 = vmax.f32 %v256, 0.0
    %v260 = vld [vmem:[%s4] sm:$0xff]
    %v261 = vld [vmem:[%s4 + $0x8] sm:$0xff]
    %v262 = vld [vmem:[%s4 + $0x10] sm:$0xff]
    %v263 = vld [vmem:[%s4 + $0x18] sm:$0xff]
    %v265 = vsel %vm109, %v259, 0
    %267 = vmatprep.subr.mxu0 0.0
    %268 = vmatpush1.msra.mxu0 0.0
    %269 = vmatprep.subr.mxu0 0.0
    %270 = vmatpush1.msra.mxu0 0.0
    %271 = vmatprep.subr.mxu0 0.0
    %272 = vmatpush1.msra.mxu0 0.0
    %273 = vmatprep.subr.mxu0 0.0
    %274 = vmatpush1.msra.mxu0 0.0
    %275 = vmatprep.subr.mxu0 0.0
    %276 = vmatpush1.msra.mxu0 0.0
    %277 = vmatprep.subr.mxu0 0.0
    %278 = vmatpush1.msra.mxu0 0.0
    %279 = vmatprep.subr.mxu0 0.0
    %280 = vmatpush1.msra.mxu0 0.0
    %281 = vmatprep.subr.mxu0 0.0
    %282 = vmatpush1.msra.mxu0 0.0
    %283 = vmatprep.subr.mxu0 0.0
    %284 = vmatpush1.msra.mxu0 0.0
    %285 = vmatprep.subr.mxu0 0.0
    %286 = vmatpush1.msra.mxu0 0.0
    %287 = vmatprep.subr.mxu0 0.0
    %288 = vmatpush1.msra.mxu0 0.0
    %289 = vmatprep.subr.mxu0 0.0
    %290 = vmatpush1.msra.mxu0 0.0
    %291 = vmatprep.subr.mxu0 0.0
    %292 = vmatpush1.msra.mxu0 %v263
    %293 = vmatprep.subr.mxu0 0.0
    %294 = vmatpush1.msra.mxu0 %v262
    %295 = vmatprep.subr.mxu0 0.0
    %296 = vmatpush1.msra.mxu0 %v261
    %297 = vmatprep.subr.mxu0 0.0
    %298 = vmatpush1.msra.mxu0 %v260
    %299 = vmatprep.subr.mxu0 0.0
    %300 = vmatpush2.msra.mxu0 0.0
    %301 = vmatprep.subr.mxu0 0.0
    %302 = vmatpush2.msra.mxu0 0.0
    %303 = vmatprep.subr.mxu0 0.0
    %304 = vmatpush2.msra.mxu0 0.0
    %305 = vmatprep.subr.mxu0 0.0
    %306 = vmatpush2.msra.mxu0 0.0
    %307 = vmatprep.subr.mxu0 0.0
    %308 = vmatpush2.msra.mxu0 0.0
    %309 = vmatprep.subr.mxu0 0.0
    %310 = vmatpush2.msra.mxu0 0.0
    %311 = vmatprep.subr.mxu0 0.0
    %312 = vmatpush2.msra.mxu0 0.0
    %313 = vmatprep.subr.mxu0 0.0
    %314 = vmatpush2.msra.mxu0 0.0
    %315 = vmatprep.subr.mxu0 0.0
    %316 = vmatpush2.msra.mxu0 0.0
    %317 = vmatprep.subr.mxu0 0.0
    %318 = vmatpush2.msra.mxu0 0.0
    %319 = vmatprep.subr.mxu0 0.0
    %320 = vmatpush2.msra.mxu0 0.0
    %321 = vmatprep.subr.mxu0 0.0
    %322 = vmatpush2.msra.mxu0 0.0
    %323 = vmatprep.subr.mxu0 0.0
    %324 = vmatpush2.msra.mxu0 0.0
    %325 = vmatprep.subr.mxu0 0.0
    %326 = vmatpush2.msra.mxu0 0.0
    %327 = vmatprep.subr.mxu0 0.0
    %328 = vmatpush2.msra.mxu0 0.0
    %329 = vmatprep.subr.mxu0 0.0
    %330 = vmatpush2.msra.mxu0 0.0
    %331 = vmatprep.mubr.f32.mxu0 0.0
    %332 = vmatmul.mubr.f32.gmra.mxu0 %v265
    %v333 = vpop.f32.mrf.mxu0
    %v334 = vadd.f32 0.0, %v333
    %v335 = vpop.f32.mrf.mxu0
    %336 = vdwg.mxu0
    %337 = vst.msk [vmem:[#allocation2] sm:$0xff] %vm30, %v334
    // Predicated region
    $region22: #{tpu_custom_call.1} parent=1 // pred_check
      _
    $region23: #{tpu_custom_call.1} parent=1 // pred_check_branch
      %339 = sbr.rel (0) target = $region25
    $region24: #{tpu_custom_call.1} parent=1 // pred_region
      %s341 = ssub.s32 128, 128
      %342 = vsyncadd [#allocation3], %s341
      %s344 = sshll.u32 [#allocation2], 4
      %s345 = int_to_ptr.vmem [resolvable:$true] %s344
      %347 = dma.vmem_to_hbm [thread:$0]  %s345, 128, %s5, [#allocation3]
    $region25: #{tpu_custom_call.1} parent=1 // pred_fallthru
      _
    // Predicated region
    $region26: #{tpu_custom_call.1} parent=1 // pred_check
      _
    $region27: #{tpu_custom_call.1} parent=1 // pred_check_branch
      %349 = sbr.rel (0) target = $region29
    $region28: #{tpu_custom_call.1} parent=1 // pred_region
      %350 = dma.done [#allocation3], 128
    $region29: #{tpu_custom_call.1} parent=1 // pred_fallthru
      _
    %351 = vsyncpa [#allocation3], 1

</llo_original>
